<compile_context>
chip_gen: v6e
topology: v6e:2x2x1
jax: 0.10.0
libtpu: 0.0.40
codegen_flags: <defaults>
</compile_context>

<pallas_src>
import functools
import math

import jax
import jax.numpy as jnp
from jax.experimental import pallas as pl
from jax.experimental.pallas import tpu as pltpu


def _round_up(x, m):
    return ((x + m - 1) // m) * m


def _mlp_kernel(*refs, num_layers):
    # refs = (x_ref, w1..wL, b1..bL, o_ref)
    # x_ref : [TILE_B, hidden_dim]  batch tile, pipelined over the grid
    # w_l   : [d_in_l, d_out_l]     unpadded, VMEM-resident (constant idx map)
    # b_l   : [1, d_out_l]          f32, VMEM-resident
    # o_ref : [TILE_B, num_eval]    exact-width output tile (no padded columns)
    x_ref = refs[0]
    w_refs = refs[1:1 + num_layers]
    b_refs = refs[1 + num_layers:1 + 2 * num_layers]
    o_ref = refs[1 + 2 * num_layers]

    h = x_ref[...].astype(jnp.float32)              # elementwise path stays f32
    for l in range(num_layers):                     # static unroll over 4 layers
        w = w_refs[l][...]
        acc = jnp.dot(h.astype(w.dtype), w,         # bf16 (default) / f32 operands
                      preferred_element_type=jnp.float32)
        h = acc + b_refs[l][...]                    # [1, d_out] broadcast, f32
        if l < num_layers - 1:
            h = jnp.maximum(h, 0.0)                 # ReLU
    o_ref[...] = h.astype(o_ref.dtype)


def prepare_params(params, num_layers=4, compute_dtype=jnp.bfloat16):
    """Cast weights to the MXU operand dtype; biases stay f32 as [1, d_out]."""
    ws = tuple(params[f"w{i+1}"].astype(compute_dtype) for i in range(num_layers))
    bs = tuple(params[f"b{i+1}"].astype(jnp.float32).reshape(1, -1)
               for i in range(num_layers))
    return ws, bs


def _choose_batch_tile(batch, tile_cap):
    """Minimal-waste, sublane-aligned batch tile with >=2 grid steps when possible."""
    steps = max(pl.cdiv(batch, tile_cap), 1)
    if steps < 2 and batch >= 16:
        steps = 2          # engage v7x's 2nd TensorCore via the "parallel" axis
    return _round_up(pl.cdiv(batch, steps), 8)


def predictor_eig_forward(x, ws, bs, *, out_dtype=None, tile_b=2048):
    """x: [batch, hidden_dim]; (ws, bs) from prepare_params. Returns [batch, num_eval]."""
    batch, feat = x.shape
    num_layers = len(ws)
    assert ws[0].shape[0] == feat
    num_eval = ws[-1].shape[1]
    out_dtype = x.dtype if out_dtype is None else out_dtype

    tb = _choose_batch_tile(batch, tile_b)
    grid = (pl.cdiv(batch, tb),)

    flops = 2 * batch * sum(w.shape[0] * w.shape[1] for w in ws)
    bytes_accessed = (x.size * x.dtype.itemsize
                      + sum(w.size * w.dtype.itemsize for w in ws)
                      + sum(b.size * b.dtype.itemsize for b in bs)
                      + batch * num_eval * jnp.dtype(out_dtype).itemsize)

    in_specs = [pl.BlockSpec((tb, feat), lambda i: (i, 0))]            # x: pipelined
    in_specs += [pl.BlockSpec(w.shape, lambda i: (0, 0)) for w in ws]  # resident
    in_specs += [pl.BlockSpec(b.shape, lambda i: (0, 0)) for b in bs]  # resident

    return pl.pallas_call(
        functools.partial(_mlp_kernel, num_layers=num_layers),
        out_shape=jax.ShapeDtypeStruct((batch, num_eval), out_dtype),
        grid=grid,
        in_specs=in_specs,
        out_specs=pl.BlockSpec((tb, num_eval), lambda i: (i, 0)),
        compiler_params=pltpu.CompilerParams(
            dimension_semantics=("parallel",),      # batch axis across TCs on v7x
            vmem_limit_bytes=32 * 1024 * 1024,      # safe on v5e/v6e/v7x
        ),
        cost_estimate=pl.CostEstimate(flops=flops, transcendentals=0,
                                      bytes_accessed=bytes_accessed),
    )(x, *ws, *bs)


def init_params(key, hidden_dim, Lvp, num_eval, dtype=jnp.float32):
    """Deterministic init mimicking nn.Linear default (Kaiming-uniform-ish)."""
    dims = [hidden_dim, Lvp[0], Lvp[1], Lvp[2], num_eval]
    params = {}
    for i in range(4):
        fan_in, fan_out = dims[i], dims[i + 1]
        key, kw, kb = jax.random.split(key, 3)
        bound = 1.0 / math.sqrt(fan_in)
        # stored as [in, out] so the kernel does x @ w directly
        params[f"w{i+1}"] = jax.random.uniform(
            kw, (fan_in, fan_out), dtype=dtype, minval=-bound, maxval=bound)
        params[f"b{i+1}"] = jax.random.uniform(
            kb, (fan_out,), dtype=dtype, minval=-bound, maxval=bound)
    return params


def reference_forward(x, params):
    h = x
    for i in range(1, 4):
        h = jnp.maximum(h @ params[f"w{i}"] + params[f"b{i}"], 0.0)
    return h @ params["w4"] + params["b4"]


if __name__ == "__main__":
    # Small shapes consistent with the module's forward.
    batch = 8
    hidden_dim = 32
    Lvp = [64, 64, 32]
    num_eval = 8

    key = jax.random.PRNGKey(0)
    key, kx = jax.random.split(key)
    x = jax.random.normal(kx, (batch, hidden_dim), dtype=jnp.float32)

    params = init_params(key, hidden_dim, Lvp, num_eval)
    ref = reference_forward(x, params)

    # Debug/reference mode: f32 MXU operands, tight check.
    ws32, bs32 = prepare_params(params, compute_dtype=jnp.float32)
    out32 = jax.block_until_ready(predictor_eig_forward(x, ws32, bs32))
    assert out32.shape == (batch, num_eval)
    assert jnp.allclose(out32, ref, atol=1e-5, rtol=1e-5), "f32 mismatch vs reference"

    # Default mode: bf16 MXU operands (f32 accumulate / bias / ReLU).
    wsbf, bsbf = prepare_params(params)           # compute_dtype=bf16 default
    outbf = jax.block_until_ready(predictor_eig_forward(x, wsbf, bsbf))
    assert outbf.shape == (batch, num_eval)
    assert jnp.allclose(outbf, ref, atol=5e-2, rtol=5e-2), "bf16 mismatch vs reference"

    print("KERNEL_OK")
</pallas_src>

<mosaic_0001>
module attributes {stable_mosaic.version = 11 : i64} {
  func.func @_mlp_kernel(%arg0: i32, %arg1: memref<8x32xf32, #tpu.memory_space<vmem>>, %arg2: memref<32x64xf32, #tpu.memory_space<vmem>>, %arg3: memref<64x64xf32, #tpu.memory_space<vmem>>, %arg4: memref<64x32xf32, #tpu.memory_space<vmem>>, %arg5: memref<32x8xf32, #tpu.memory_space<vmem>>, %arg6: memref<1x64xf32, #tpu.memory_space<vmem>>, %arg7: memref<1x64xf32, #tpu.memory_space<vmem>>, %arg8: memref<1x32xf32, #tpu.memory_space<vmem>>, %arg9: memref<1x8xf32, #tpu.memory_space<vmem>>, %arg10: memref<8x8xf32, #tpu.memory_space<vmem>>) attributes {dimension_semantics = [#tpu.dimension_semantics<parallel>], iteration_bounds = array<i64: 1>, scalar_prefetch = 0 : i64, scratch_operands = 0 : i64, tpu.core_type = #tpu.core_type<tc>, window_params = [{transform_indices = @transform_0, window_bounds = array<i64: 8, 32>}, {pipeline_mode = #tpu.pipeline_mode<synchronous>, transform_indices = @transform_1, window_bounds = array<i64: 32, 64>}, {pipeline_mode = #tpu.pipeline_mode<synchronous>, transform_indices = @transform_2, window_bounds = array<i64: 64, 64>}, {pipeline_mode = #tpu.pipeline_mode<synchronous>, transform_indices = @transform_3, window_bounds = array<i64: 64, 32>}, {pipeline_mode = #tpu.pipeline_mode<synchronous>, transform_indices = @transform_4, window_bounds = array<i64: 32, 8>}, {pipeline_mode = #tpu.pipeline_mode<synchronous>, transform_indices = @transform_5, window_bounds = array<i64: 1, 64>}, {pipeline_mode = #tpu.pipeline_mode<synchronous>, transform_indices = @transform_6, window_bounds = array<i64: 1, 64>}, {pipeline_mode = #tpu.pipeline_mode<synchronous>, transform_indices = @transform_7, window_bounds = array<i64: 1, 32>}, {pipeline_mode = #tpu.pipeline_mode<synchronous>, transform_indices = @transform_8, window_bounds = array<i64: 1, 8>}, {transform_indices = @transform_9, window_bounds = array<i64: 8, 8>}]} {
    %c0 = arith.constant 0 : index
    %c0_0 = arith.constant 0 : index
    %0 = vector.load %arg1[%c0, %c0_0] : memref<8x32xf32, #tpu.memory_space<vmem>>, vector<8x32xf32>
    %c0_1 = arith.constant 0 : index
    %c0_2 = arith.constant 0 : index
    %1 = vector.load %arg2[%c0_1, %c0_2] : memref<32x64xf32, #tpu.memory_space<vmem>>, vector<32x64xf32>
    %cst = arith.constant dense<0.000000e+00> : vector<8x64xf32>
    %2 = tpu.matmul %0, %1, %cst {dimension_numbers = #tpu.dot_dimension_numbers<[1], [0], [0], [1], [0, 0, 1, 1], [], []>} : vector<8x32xf32>, vector<32x64xf32>, vector<8x64xf32> -> vector<8x64xf32>
    %c0_3 = arith.constant 0 : index
    %c0_4 = arith.constant 0 : index
    %3 = vector.load %arg6[%c0_3, %c0_4] : memref<1x64xf32, #tpu.memory_space<vmem>>, vector<1x64xf32>
    %4 = vector.broadcast %3 : vector<1x64xf32> to vector<8x64xf32>
    %5 = arith.addf %2, %4 : vector<8x64xf32>
    %cst_5 = arith.constant 0.000000e+00 : f32
    %6 = vector.broadcast %cst_5 : f32 to vector<8x64xf32>
    %7 = arith.maximumf %5, %6 : vector<8x64xf32>
    %c0_6 = arith.constant 0 : index
    %c0_7 = arith.constant 0 : index
    %8 = vector.load %arg3[%c0_6, %c0_7] : memref<64x64xf32, #tpu.memory_space<vmem>>, vector<64x64xf32>
    %cst_8 = arith.constant dense<0.000000e+00> : vector<8x64xf32>
    %9 = tpu.matmul %7, %8, %cst_8 {dimension_numbers = #tpu.dot_dimension_numbers<[1], [0], [0], [1], [0, 0, 1, 1], [], []>} : vector<8x64xf32>, vector<64x64xf32>, vector<8x64xf32> -> vector<8x64xf32>
    %c0_9 = arith.constant 0 : index
    %c0_10 = arith.constant 0 : index
    %10 = vector.load %arg7[%c0_9, %c0_10] : memref<1x64xf32, #tpu.memory_space<vmem>>, vector<1x64xf32>
    %11 = vector.broadcast %10 : vector<1x64xf32> to vector<8x64xf32>
    %12 = arith.addf %9, %11 : vector<8x64xf32>
    %cst_11 = arith.constant 0.000000e+00 : f32
    %13 = vector.broadcast %cst_11 : f32 to vector<8x64xf32>
    %14 = arith.maximumf %12, %13 : vector<8x64xf32>
    %c0_12 = arith.constant 0 : index
    %c0_13 = arith.constant 0 : index
    %15 = vector.load %arg4[%c0_12, %c0_13] : memref<64x32xf32, #tpu.memory_space<vmem>>, vector<64x32xf32>
    %cst_14 = arith.constant dense<0.000000e+00> : vector<8x32xf32>
    %16 = tpu.matmul %14, %15, %cst_14 {dimension_numbers = #tpu.dot_dimension_numbers<[1], [0], [0], [1], [0, 0, 1, 1], [], []>} : vector<8x64xf32>, vector<64x32xf32>, vector<8x32xf32> -> vector<8x32xf32>
    %c0_15 = arith.constant 0 : index
    %c0_16 = arith.constant 0 : index
    %17 = vector.load %arg8[%c0_15, %c0_16] : memref<1x32xf32, #tpu.memory_space<vmem>>, vector<1x32xf32>
    %18 = vector.broadcast %17 : vector<1x32xf32> to vector<8x32xf32>
    %19 = arith.addf %16, %18 : vector<8x32xf32>
    %cst_17 = arith.constant 0.000000e+00 : f32
    %20 = vector.broadcast %cst_17 : f32 to vector<8x32xf32>
    %21 = arith.maximumf %19, %20 : vector<8x32xf32>
    %c0_18 = arith.constant 0 : index
    %c0_19 = arith.constant 0 : index
    %22 = vector.load %arg5[%c0_18, %c0_19] : memref<32x8xf32, #tpu.memory_space<vmem>>, vector<32x8xf32>
    %cst_20 = arith.constant dense<0.000000e+00> : vector<8x8xf32>
    %23 = tpu.matmul %21, %22, %cst_20 {dimension_numbers = #tpu.dot_dimension_numbers<[1], [0], [0], [1], [0, 0, 1, 1], [], []>} : vector<8x32xf32>, vector<32x8xf32>, vector<8x8xf32> -> vector<8x8xf32>
    %c0_21 = arith.constant 0 : index
    %c0_22 = arith.constant 0 : index
    %24 = vector.load %arg9[%c0_21, %c0_22] : memref<1x8xf32, #tpu.memory_space<vmem>>, vector<1x8xf32>
    %25 = vector.broadcast %24 : vector<1x8xf32> to vector<8x8xf32>
    %26 = arith.addf %23, %25 : vector<8x8xf32>
    %c0_23 = arith.constant 0 : index
    %c0_24 = arith.constant 0 : index
    %27 = vector.load %arg10[%c0_23, %c0_24] : memref<8x8xf32, #tpu.memory_space<vmem>>, vector<8x8xf32>
    tpu.vector_store %arg10[%c0_23, %c0_24], %26 {strides = array<i32>} : memref<8x8xf32, #tpu.memory_space<vmem>>, vector<8x8xf32>,
    return
  }
  func.func @transform_0(%arg0: i32) -> (i32, i32) {
    %c0_i32 = arith.constant 0 : i32
    %c0_i32_0 = arith.constant 0 : i32
    return %arg0, %c0_i32 : i32, i32
  }
  func.func @transform_1(%arg0: i32) -> (i32, i32) {
    %c0_i32 = arith.constant 0 : i32
    %c0_i32_0 = arith.constant 0 : i32
    %c0_i32_1 = arith.constant 0 : i32
    return %c0_i32, %c0_i32_0 : i32, i32
  }
  func.func @transform_2(%arg0: i32) -> (i32, i32) {
    %c0_i32 = arith.constant 0 : i32
    %c0_i32_0 = arith.constant 0 : i32
    %c0_i32_1 = arith.constant 0 : i32
    return %c0_i32, %c0_i32_0 : i32, i32
  }
  func.func @transform_3(%arg0: i32) -> (i32, i32) {
    %c0_i32 = arith.constant 0 : i32
    %c0_i32_0 = arith.constant 0 : i32
    %c0_i32_1 = arith.constant 0 : i32
    return %c0_i32, %c0_i32_0 : i32, i32
  }
  func.func @transform_4(%arg0: i32) -> (i32, i32) {
    %c0_i32 = arith.constant 0 : i32
    %c0_i32_0 = arith.constant 0 : i32
    %c0_i32_1 = arith.constant 0 : i32
    return %c0_i32, %c0_i32_0 : i32, i32
  }
  func.func @transform_5(%arg0: i32) -> (i32, i32) {
    %c0_i32 = arith.constant 0 : i32
    %c0_i32_0 = arith.constant 0 : i32
    %c0_i32_1 = arith.constant 0 : i32
    return %c0_i32, %c0_i32_0 : i32, i32
  }
  func.func @transform_6(%arg0: i32) -> (i32, i32) {
    %c0_i32 = arith.constant 0 : i32
    %c0_i32_0 = arith.constant 0 : i32
    %c0_i32_1 = arith.constant 0 : i32
    return %c0_i32, %c0_i32_0 : i32, i32
  }
  func.func @transform_7(%arg0: i32) -> (i32, i32) {
    %c0_i32 = arith.constant 0 : i32
    %c0_i32_0 = arith.constant 0 : i32
    %c0_i32_1 = arith.constant 0 : i32
    return %c0_i32, %c0_i32_0 : i32, i32
  }
  func.func @transform_8(%arg0: i32) -> (i32, i32) {
    %c0_i32 = arith.constant 0 : i32
    %c0_i32_0 = arith.constant 0 : i32
    %c0_i32_1 = arith.constant 0 : i32
    return %c0_i32, %c0_i32_0 : i32, i32
  }
  func.func @transform_9(%arg0: i32) -> (i32, i32) {
    %c0_i32 = arith.constant 0 : i32
    %c0_i32_0 = arith.constant 0 : i32
    return %arg0, %c0_i32 : i32, i32
  }
}

</mosaic_0001>

<llo_original>
// kernel: tpu_custom_call.1
$region0: #{tpu_custom_call.1}
  #allocation0 [shape = 'u32[]', space=smem, size = 0x4, offset = 0x4, fixed_abs, tag = 'smem constant byte address 0x4 - core index']
  #allocation1 [shape = 'u32[144,128]{1,0:T(1,128)}', space=vmem, size = 0x12000, scoped, tag = 'internal scratch']
  %s0 = inlined_call_operand.vmem [shape: f32[8,32], index: 0, kind: input, shape index: {}]
  %s1 = inlined_call_operand.vmem [shape: f32[32,64], index: 1, kind: input, shape index: {}]
  %s2 = inlined_call_operand.vmem [shape: f32[64,64], index: 2, kind: input, shape index: {}]
  %s3 = inlined_call_operand.vmem [shape: f32[64,32], index: 3, kind: input, shape index: {}]
  %s4 = inlined_call_operand.vmem [shape: f32[32,8], index: 4, kind: input, shape index: {}]
  %s5 = inlined_call_operand.vmem [shape: f32[1,64], index: 5, kind: input, shape index: {}]
  %s6 = inlined_call_operand.vmem [shape: f32[1,64], index: 6, kind: input, shape index: {}]
  %s7 = inlined_call_operand.vmem [shape: f32[1,32], index: 7, kind: input, shape index: {}]
  %s8 = inlined_call_operand.vmem [shape: f32[1,8], index: 8, kind: input, shape index: {}]
  %s9 = inlined_call_operand.hbm [shape: f32[8,8], index: 9, kind: output, shape index: {}]
  %s10 = sld [smem:[#allocation0]]
  $region46: #{tpu_custom_call.1} parent=0
    _
  %s12 = ssub.s32 1, %s10
  %s13 = scalar_select 0, %s12, %s10
  $region1: #{tpu_custom_call.1} parent=0
    #allocation2 [shape = 'u8[4096]{0}', space=vmem, size = 0x1000, scoped, tag = 'output window, operand 0, single buffered']
    #allocation3 [shape = 's32[1]{0}', space=sflag, size = 0x4, scoped, tag = 'scoped memory for tpu_custom_call.1']
    %14 = vsyncpa [#allocation3], 0
    // Predicated region
    $region2: #{tpu_custom_call.1} parent=1 // pred_check
      _
    $region3: #{tpu_custom_call.1} parent=1 // pred_check_branch
      %16 = sbr.rel (0) target = $region5
    $region4: #{tpu_custom_call.1} parent=1 // pred_region
      _
    $region5: #{tpu_custom_call.1} parent=1 // pred_fallthru
      _
    // Predicated region
    $region6: #{tpu_custom_call.1} parent=1 // pred_check
      _
    $region7: #{tpu_custom_call.1} parent=1 // pred_check_branch
      %18 = sbr.rel (0) target = $region9
    $region8: #{tpu_custom_call.1} parent=1 // pred_region
      _
    $region9: #{tpu_custom_call.1} parent=1 // pred_fallthru
      _
    // Predicated region
    $region10: #{tpu_custom_call.1} parent=1 // pred_check
      _
    $region11: #{tpu_custom_call.1} parent=1 // pred_check_branch
      %20 = sbr.rel (0) target = $region13
    $region12: #{tpu_custom_call.1} parent=1 // pred_region
      _
    $region13: #{tpu_custom_call.1} parent=1 // pred_fallthru
      _
    // Predicated region
    $region14: #{tpu_custom_call.1} parent=1 // pred_check
      _
    $region15: #{tpu_custom_call.1} parent=1 // pred_check_branch
      %22 = sbr.rel (0) target = $region17
    $region16: #{tpu_custom_call.1} parent=1 // pred_region
      _
    $region17: #{tpu_custom_call.1} parent=1 // pred_fallthru
      _
    // Predicated region
    $region18: #{tpu_custom_call.1} parent=1 // pred_check
      _
    $region19: #{tpu_custom_call.1} parent=1 // pred_check_branch
      %24 = sbr.rel (0) target = $region21
    $region20: #{tpu_custom_call.1} parent=1 // pred_region
      _
    $region21: #{tpu_custom_call.1} parent=1 // pred_fallthru
      _
    // Predicated region
    $region22: #{tpu_custom_call.1} parent=1 // pred_check
      _
    $region23: #{tpu_custom_call.1} parent=1 // pred_check_branch
      %26 = sbr.rel (0) target = $region25
    $region24: #{tpu_custom_call.1} parent=1 // pred_region
      _
    $region25: #{tpu_custom_call.1} parent=1 // pred_fallthru
      _
    // Predicated region
    $region26: #{tpu_custom_call.1} parent=1 // pred_check
      _
    $region27: #{tpu_custom_call.1} parent=1 // pred_check_branch
      %28 = sbr.rel (0) target = $region29
    $region28: #{tpu_custom_call.1} parent=1 // pred_region
      _
    $region29: #{tpu_custom_call.1} parent=1 // pred_fallthru
      _
    // Predicated region
    $region30: #{tpu_custom_call.1} parent=1 // pred_check
      _
    $region31: #{tpu_custom_call.1} parent=1 // pred_check_branch
      %30 = sbr.rel (0) target = $region33
    $region32: #{tpu_custom_call.1} parent=1 // pred_region
      _
    $region33: #{tpu_custom_call.1} parent=1 // pred_fallthru
      _
    // Predicated region
    $region34: #{tpu_custom_call.1} parent=1 // pred_check
      _
    $region35: #{tpu_custom_call.1} parent=1 // pred_check_branch
      %32 = sbr.rel (0) target = $region37
    $region36: #{tpu_custom_call.1} parent=1 // pred_region
      _
    $region37: #{tpu_custom_call.1} parent=1 // pred_fallthru
      _
    %v33 = vld [vmem:[%s0] sm:$0xff]
    %v34 = vld [vmem:[%s1] sm:$0xff]
    %v35 = vld [vmem:[%s1 + $0x8] sm:$0xff]
    %v36 = vld [vmem:[%s1 + $0x10] sm:$0xff]
    %v37 = vld [vmem:[%s1 + $0x18] sm:$0xff]
    %v38 = vld [vmem:[%s5] sm:$0x1]
    %v40 = vlaneseq
    %v41 = vshrl.u32 %v40, 7
    %v42 = vsub.s32 0, %v41
    %v43 = vrot.slane %v38, %v42
    %vm45 = vcmask 261120
    %v47 = vsel %vm45, %v33, 0
    %49 = vmatprep.subr.mxu0 0.0
    %50 = vmatpush1.msra.mxu0 0.0
    %51 = vmatprep.subr.mxu0 0.0
    %52 = vmatpush1.msra.mxu0 0.0
    %53 = vmatprep.subr.mxu0 0.0
    %54 = vmatpush1.msra.mxu0 0.0
    %55 = vmatprep.subr.mxu0 0.0
    %56 = vmatpush1.msra.mxu0 0.0
    %57 = vmatprep.subr.mxu0 0.0
    %58 = vmatpush1.msra.mxu0 0.0
    %59 = vmatprep.subr.mxu0 0.0
    %60 = vmatpush1.msra.mxu0 0.0
    %61 = vmatprep.subr.mxu0 0.0
    %62 = vmatpush1.msra.mxu0 0.0
    %63 = vmatprep.subr.mxu0 0.0
    %64 = vmatpush1.msra.mxu0 0.0
    %65 = vmatprep.subr.mxu0 0.0
    %66 = vmatpush1.msra.mxu0 0.0
    %67 = vmatprep.subr.mxu0 0.0
    %68 = vmatpush1.msra.mxu0 0.0
    %69 = vmatprep.subr.mxu0 0.0
    %70 = vmatpush1.msra.mxu0 0.0
    %71 = vmatprep.subr.mxu0 0.0
    %72 = vmatpush1.msra.mxu0 0.0
    %73 = vmatprep.subr.mxu0 0.0
    %74 = vmatpush1.msra.mxu0 %v37
    %75 = vmatprep.subr.mxu0 0.0
    %76 = vmatpush1.msra.mxu0 %v36
    %77 = vmatprep.subr.mxu0 0.0
    %78 = vmatpush1.msra.mxu0 %v35
    %79 = vmatprep.subr.mxu0 0.0
    %80 = vmatpush1.msra.mxu0 %v34
    %81 = vmatprep.subr.mxu0 0.0
    %82 = vmatpush2.msra.mxu0 0.0
    %83 = vmatprep.subr.mxu0 0.0
    %84 = vmatpush2.msra.mxu0 0.0
    %85 = vmatprep.subr.mxu0 0.0
    %86 = vmatpush2.msra.mxu0 0.0
    %87 = vmatprep.subr.mxu0 0.0
    %88 = vmatpush2.msra.mxu0 0.0
    %89 = vmatprep.subr.mxu0 0.0
    %90 = vmatpush2.msra.mxu0 0.0
    %91 = vmatprep.subr.mxu0 0.0
    %92 = vmatpush2.msra.mxu0 0.0
    %93 = vmatprep.subr.mxu0 0.0
    %94 = vmatpush2.msra.mxu0 0.0
    %95 = vmatprep.subr.mxu0 0.0
    %96 = vmatpush2.msra.mxu0 0.0
    %97 = vmatprep.subr.mxu0 0.0
    %98 = vmatpush2.msra.mxu0 0.0
    %99 = vmatprep.subr.mxu0 0.0
    %100 = vmatpush2.msra.mxu0 0.0
    %101 = vmatprep.subr.mxu0 0.0
    %102 = vmatpush2.msra.mxu0 0.0
    %103 = vmatprep.subr.mxu0 0.0
    %104 = vmatpush2.msra.mxu0 0.0
    %105 = vmatprep.subr.mxu0 0.0
    %106 = vmatpush2.msra.mxu0 0.0
    %107 = vmatprep.subr.mxu0 0.0
    %108 = vmatpush2.msra.mxu0 0.0
    %109 = vmatprep.subr.mxu0 0.0
    %110 = vmatpush2.msra.mxu0 0.0
    %111 = vmatprep.subr.mxu0 0.0
    %112 = vmatpush2.msra.mxu0 0.0
    %113 = vmatprep.mubr.f32.mxu0 0.0
    %114 = vmatmul.mubr.f32.gmra.mxu0 %v47
    %v115 = vpop.f32.mrf.mxu0
    %v116 = vadd.f32 %v43, %v115
    %v117 = vpop.f32.mrf.mxu0
    %118 = vdwg.mxu0
    %v119 = vmax.f32 %v116, 0.0
    %v120 = vld [vmem:[%s2] sm:$0xff]
    %v121 = vld [vmem:[%s2 + $0x8] sm:$0xff]
    %v122 = vld [vmem:[%s2 + $0x10] sm:$0xff]
    %v123 = vld [vmem:[%s2 + $0x18] sm:$0xff]
    %v124 = vld [vmem:[%s2 + $0x20] sm:$0xff]
    %v125 = vld [vmem:[%s2 + $0x28] sm:$0xff]
    %v126 = vld [vmem:[%s2 + $0x30] sm:$0xff]
    %v127 = vld [vmem:[%s2 + $0x38] sm:$0xff]
    %v128 = vld [vmem:[%s6] sm:$0x1]
    %v130 = vlaneseq
    %v131 = vshrl.u32 %v130, 7
    %v132 = vsub.s32 0, %v131
    %v133 = vrot.slane %v128, %v132
    %vm135 = vcmask 523264
    %v137 = vsel %vm135, %v119, 0
    %139 = vmatprep.subr.mxu0 0.0
    %140 = vmatpush1.msra.mxu0 0.0
    %141 = vmatprep.subr.mxu0 0.0
    %142 = vmatpush1.msra.mxu0 0.0
    %143 = vmatprep.subr.mxu0 0.0
    %144 = vmatpush1.msra.mxu0 0.0
    %145 = vmatprep.subr.mxu0 0.0
    %146 = vmatpush1.msra.mxu0 0.0
    %147 = vmatprep.subr.mxu0 0.0
    %148 = vmatpush1.msra.mxu0 0.0
    %149 = vmatprep.subr.mxu0 0.0
    %150 = vmatpush1.msra.mxu0 0.0
    %151 = vmatprep.subr.mxu0 0.0
    %152 = vmatpush1.msra.mxu0 0.0
    %153 = vmatprep.subr.mxu0 0.0
    %154 = vmatpush1.msra.mxu0 0.0
    %155 = vmatprep.subr.mxu0 0.0
    %156 = vmatpush1.msra.mxu0 %v127
    %157 = vmatprep.subr.mxu0 0.0
    %158 = vmatpush1.msra.mxu0 %v126
    %159 = vmatprep.subr.mxu0 0.0
    %160 = vmatpush1.msra.mxu0 %v125
    %161 = vmatprep.subr.mxu0 0.0
    %162 = vmatpush1.msra.mxu0 %v124
    %163 = vmatprep.subr.mxu0 0.0
    %164 = vmatpush1.msra.mxu0 %v123
    %165 = vmatprep.subr.mxu0 0.0
    %166 = vmatpush1.msra.mxu0 %v122
    %167 = vmatprep.subr.mxu0 0.0
    %168 = vmatpush1.msra.mxu0 %v121
    %169 = vmatprep.subr.mxu0 0.0
    %170 = vmatpush1.msra.mxu0 %v120
    %171 = vmatprep.subr.mxu0 0.0
    %172 = vmatpush2.msra.mxu0 0.0
    %173 = vmatprep.subr.mxu0 0.0
    %174 = vmatpush2.msra.mxu0 0.0
    %175 = vmatprep.subr.mxu0 0.0
    %176 = vmatpush2.msra.mxu0 0.0
    %177 = vmatprep.subr.mxu0 0.0
    %178 = vmatpush2.msra.mxu0 0.0
    %179 = vmatprep.subr.mxu0 0.0
    %180 = vmatpush2.msra.mxu0 0.0
    %181 = vmatprep.subr.mxu0 0.0
    %182 = vmatpush2.msra.mxu0 0.0
    %183 = vmatprep.subr.mxu0 0.0
    %184 = vmatpush2.msra.mxu0 0.0
    %185 = vmatprep.subr.mxu0 0.0
    %186 = vmatpush2.msra.mxu0 0.0
    %187 = vmatprep.subr.mxu0 0.0
    %188 = vmatpush2.msra.mxu0 0.0
    %189 = vmatprep.subr.mxu0 0.0
    %190 = vmatpush2.msra.mxu0 0.0
    %191 = vmatprep.subr.mxu0 0.0
    %192 = vmatpush2.msra.mxu0 0.0
    %193 = vmatprep.subr.mxu0 0.0
    %194 = vmatpush2.msra.mxu0 0.0
    %195 = vmatprep.subr.mxu0 0.0
    %196 = vmatpush2.msra.mxu0 0.0
    %197 = vmatprep.subr.mxu0 0.0
    %198 = vmatpush2.msra.mxu0 0.0
    %199 = vmatprep.subr.mxu0 0.0
    %200 = vmatpush2.msra.mxu0 0.0
    %201 = vmatprep.subr.mxu0 0.0
    %202 = vmatpush2.msra.mxu0 0.0
    %203 = vmatprep.mubr.f32.mxu0 0.0
    %204 = vmatmul.mubr.f32.gmra.mxu0 %v137
    %v205 = vpop.f32.mrf.mxu0
    %v206 = vadd.f32 %v133, %v205
    %v207 = vpop.f32.mrf.mxu0
    %208 = vdwg.mxu0
    %v209 = vmax.f32 %v206, 0.0
    %v210 = vld [vmem:[%s3] sm:$0xff]
    %v211 = vld [vmem:[%s3 + $0x8] sm:$0xff]
    %v212 = vld [vmem:[%s3 + $0x10] sm:$0xff]
    %v213 = vld [vmem:[%s3 + $0x18] sm:$0xff]
    %v214 = vld [vmem:[%s3 + $0x20] sm:$0xff]
    %v215 = vld [vmem:[%s3 + $0x28] sm:$0xff]
    %v216 = vld [vmem:[%s3 + $0x30] sm:$0xff]
    %v217 = vld [vmem:[%s3 + $0x38] sm:$0xff]
    %v218 = vld [vmem:[%s7] sm:$0x1]
    %v220 = vlaneseq
    %v221 = vshrl.u32 %v220, 7
    %v222 = vsub.s32 0, %v221
    %v223 = vrot.slane %v218, %v222
    %v226 = vsel %vm135, %v209, 0
    %228 = vmatprep.subr.mxu0 0.0
    %229 = vmatpush1.msra.mxu0 0.0
    %230 = vmatprep.subr.mxu0 0.0
    %231 = vmatpush1.msra.mxu0 0.0
    %232 = vmatprep.subr.mxu0 0.0
    %233 = vmatpush1.msra.mxu0 0.0
    %234 = vmatprep.subr.mxu0 0.0
    %235 = vmatpush1.msra.mxu0 0.0
    %236 = vmatprep.subr.mxu0 0.0
    %237 = vmatpush1.msra.mxu0 0.0
    %238 = vmatprep.subr.mxu0 0.0
    %239 = vmatpush1.msra.mxu0 0.0
    %240 = vmatprep.subr.mxu0 0.0
    %241 = vmatpush1.msra.mxu0 0.0
    %242 = vmatprep.subr.mxu0 0.0
    %243 = vmatpush1.msra.mxu0 0.0
    %244 = vmatprep.subr.mxu0 0.0
    %245 = vmatpush1.msra.mxu0 %v217
    %246 = vmatprep.subr.mxu0 0.0
    %247 = vmatpush1.msra.mxu0 %v216
    %248 = vmatprep.subr.mxu0 0.0
    %249 = vmatpush1.msra.mxu0 %v215
    %250 = vmatprep.subr.mxu0 0.0
    %251 = vmatpush1.msra.mxu0 %v214
    %252 = vmatprep.subr.mxu0 0.0
    %253 = vmatpush1.msra.mxu0 %v213
    %254 = vmatprep.subr.mxu0 0.0
    %255 = vmatpush1.msra.mxu0 %v212
    %256 = vmatprep.subr.mxu0 0.0
    %257 = vmatpush1.msra.mxu0 %v211
    %258 = vmatprep.subr.mxu0 0.0
    %259 = vmatpush1.msra.mxu0 %v210
    %260 = vmatprep.subr.mxu0 0.0
    %261 = vmatpush2.msra.mxu0 0.0
    %262 = vmatprep.subr.mxu0 0.0
    %263 = vmatpush2.msra.mxu0 0.0
    %264 = vmatprep.subr.mxu0 0.0
    %265 = vmatpush2.msra.mxu0 0.0
    %266 = vmatprep.subr.mxu0 0.0
    %267 = vmatpush2.msra.mxu0 0.0
    %268 = vmatprep.subr.mxu0 0.0
    %269 = vmatpush2.msra.mxu0 0.0
    %270 = vmatprep.subr.mxu0 0.0
    %271 = vmatpush2.msra.mxu0 0.0
    %272 = vmatprep.subr.mxu0 0.0
    %273 = vmatpush2.msra.mxu0 0.0
    %274 = vmatprep.subr.mxu0 0.0
    %275 = vmatpush2.msra.mxu0 0.0
    %276 = vmatprep.subr.mxu0 0.0
    %277 = vmatpush2.msra.mxu0 0.0
    %278 = vmatprep.subr.mxu0 0.0
    %279 = vmatpush2.msra.mxu0 0.0
    %280 = vmatprep.subr.mxu0 0.0
    %281 = vmatpush2.msra.mxu0 0.0
    %282 = vmatprep.subr.mxu0 0.0
    %283 = vmatpush2.msra.mxu0 0.0
    %284 = vmatprep.subr.mxu0 0.0
    %285 = vmatpush2.msra.mxu0 0.0
    %286 = vmatprep.subr.mxu0 0.0
    %287 = vmatpush2.msra.mxu0 0.0
    %288 = vmatprep.subr.mxu0 0.0
    %289 = vmatpush2.msra.mxu0 0.0
    %290 = vmatprep.subr.mxu0 0.0
    %291 = vmatpush2.msra.mxu0 0.0
    %292 = vmatprep.mubr.f32.mxu0 0.0
    %293 = vmatmul.mubr.f32.gmra.mxu0 %v226
    %v294 = vpop.f32.mrf.mxu0
    %v295 = vadd.f32 %v223, %v294
    %v296 = vpop.f32.mrf.mxu0
    %297 = vdwg.mxu0
    %v298 = vmax.f32 %v295, 0.0
    %v299 = vld [vmem:[%s4] sm:$0xff]
    %v300 = vld [vmem:[%s4 + $0x8] sm:$0xff]
    %v301 = vld [vmem:[%s4 + $0x10] sm:$0xff]
    %v302 = vld [vmem:[%s4 + $0x18] sm:$0xff]
    %v303 = vld [vmem:[%s8] sm:$0x1]
    %v305 = vlaneseq
    %v306 = vshrl.u32 %v305, 7
    %v307 = vsub.s32 0, %v306
    %v308 = vrot.slane %v303, %v307
    %v311 = vsel %vm45, %v298, 0
    %313 = vmatprep.subr.mxu0 0.0
    %314 = vmatpush1.msra.mxu0 0.0
    %315 = vmatprep.subr.mxu0 0.0
    %316 = vmatpush1.msra.mxu0 0.0
    %317 = vmatprep.subr.mxu0 0.0
    %318 = vmatpush1.msra.mxu0 0.0
    %319 = vmatprep.subr.mxu0 0.0
    %320 = vmatpush1.msra.mxu0 0.0
    %321 = vmatprep.subr.mxu0 0.0
    %322 = vmatpush1.msra.mxu0 0.0
    %323 = vmatprep.subr.mxu0 0.0
    %324 = vmatpush1.msra.mxu0 0.0
    %325 = vmatprep.subr.mxu0 0.0
    %326 = vmatpush1.msra.mxu0 0.0
    %327 = vmatprep.subr.mxu0 0.0
    %328 = vmatpush1.msra.mxu0 0.0
    %329 = vmatprep.subr.mxu0 0.0
    %330 = vmatpush1.msra.mxu0 0.0
    %331 = vmatprep.subr.mxu0 0.0
    %332 = vmatpush1.msra.mxu0 0.0
    %333 = vmatprep.subr.mxu0 0.0
    %334 = vmatpush1.msra.mxu0 0.0
    %335 = vmatprep.subr.mxu0 0.0
    %336 = vmatpush1.msra.mxu0 0.0
    %337 = vmatprep.subr.mxu0 0.0
    %338 = vmatpush1.msra.mxu0 %v302
    %339 = vmatprep.subr.mxu0 0.0
    %340 = vmatpush1.msra.mxu0 %v301
    %341 = vmatprep.subr.mxu0 0.0
    %342 = vmatpush1.msra.mxu0 %v300
    %343 = vmatprep.subr.mxu0 0.0
    %344 = vmatpush1.msra.mxu0 %v299
    %345 = vmatprep.subr.mxu0 0.0
    %346 = vmatpush2.msra.mxu0 0.0
    %347 = vmatprep.subr.mxu0 0.0
    %348 = vmatpush2.msra.mxu0 0.0
    %349 = vmatprep.subr.mxu0 0.0
    %350 = vmatpush2.msra.mxu0 0.0
    %351 = vmatprep.subr.mxu0 0.0
    %352 = vmatpush2.msra.mxu0 0.0
    %353 = vmatprep.subr.mxu0 0.0
    %354 = vmatpush2.msra.mxu0 0.0
    %355 = vmatprep.subr.mxu0 0.0
    %356 = vmatpush2.msra.mxu0 0.0
    %357 = vmatprep.subr.mxu0 0.0
    %358 = vmatpush2.msra.mxu0 0.0
    %359 = vmatprep.subr.mxu0 0.0
    %360 = vmatpush2.msra.mxu0 0.0
    %361 = vmatprep.subr.mxu0 0.0
    %362 = vmatpush2.msra.mxu0 0.0
    %363 = vmatprep.subr.mxu0 0.0
    %364 = vmatpush2.msra.mxu0 0.0
    %365 = vmatprep.subr.mxu0 0.0
    %366 = vmatpush2.msra.mxu0 0.0
    %367 = vmatprep.subr.mxu0 0.0
    %368 = vmatpush2.msra.mxu0 0.0
    %369 = vmatprep.subr.mxu0 0.0
    %370 = vmatpush2.msra.mxu0 0.0
    %371 = vmatprep.subr.mxu0 0.0
    %372 = vmatpush2.msra.mxu0 0.0
    %373 = vmatprep.subr.mxu0 0.0
    %374 = vmatpush2.msra.mxu0 0.0
    %375 = vmatprep.subr.mxu0 0.0
    %376 = vmatpush2.msra.mxu0 0.0
    %377 = vmatprep.mubr.f32.mxu0 0.0
    %378 = vmatmul.mubr.f32.gmra.mxu0 %v311
    %v379 = vpop.f32.mrf.mxu0
    %v380 = vadd.f32 %v308, %v379
    %v381 = vpop.f32.mrf.mxu0
    %382 = vdwg.mxu0
    %vm383 = vcmask 64512
    %384 = vst.msk [vmem:[#allocation2] sm:$0xff] %vm383, %v380
    // Predicated region
    $region38: #{tpu_custom_call.1} parent=1 // pred_check
      _
    $region39: #{tpu_custom_call.1} parent=1 // pred_check_branch
      %386 = sbr.rel (0) target = $region41
    $region40: #{tpu_custom_call.1} parent=1 // pred_region
      %s388 = ssub.s32 128, 128
      %389 = vsyncadd [#allocation3], %s388
      %s391 = sshll.u32 [#allocation2], 4
      %s392 = int_to_ptr.vmem [resolvable:$true] %s391
      %394 = dma.vmem_to_hbm [thread:$0]  %s392, 128, %s9, [#allocation3]
    $region41: #{tpu_custom_call.1} parent=1 // pred_fallthru
      _
    // Predicated region
    $region42: #{tpu_custom_call.1} parent=1 // pred_check
      _
    $region43: #{tpu_custom_call.1} parent=1 // pred_check_branch
      %396 = sbr.rel (0) target = $region45
    $region44: #{tpu_custom_call.1} parent=1 // pred_region
      %397 = dma.done [#allocation3], 128
    $region45: #{tpu_custom_call.1} parent=1 // pred_fallthru
      _
    %398 = vsyncpa [#allocation3], 1

</llo_original>
